<compile_context>
chip_gen: v7x
topology: tpu7x:2x2x1
jax: 0.10.0
libtpu: 0.0.40
codegen_flags: <defaults>
</compile_context>

<pallas_src>
import math
import warnings
from functools import partial

import jax
import jax.numpy as jnp
from jax.experimental import pallas as pl
from jax.experimental.pallas import tpu as pltpu


_TARGET_BLOCK_BYTES = 8 * 1024 * 1024   # ~8 MiB of x per grid step
_VMEM_SLACK_BYTES = 4 * 1024 * 1024
_DEFAULT_VMEM_CAP = 64 * 1024 * 1024    # v7x per-TC physical; v5e/v6e have 128 MiB


def _build_pe(d_model: int, max_len: int = 43, scale_factor: float = 1.0) -> jnp.ndarray:
    """Deterministic tAPE table, returned as [d_model, max_len] float32."""
    position = jnp.arange(max_len, dtype=jnp.float32)[:, None]                      # [L, 1]
    div_term = jnp.exp(
        jnp.arange(0, d_model, 2, dtype=jnp.float32) * (-math.log(10000.0) / d_model)
    )                                                                                # [ceil(D/2)]
    arg = position * div_term[None, :] * (d_model / max_len)                         # [L, ceil(D/2)]
    n_sin = (d_model + 1) // 2
    n_cos = d_model // 2
    pe = jnp.zeros((max_len, d_model), dtype=jnp.float32)
    pe = pe.at[:, 0::2].set(jnp.sin(arg[:, :n_sin]))
    pe = pe.at[:, 1::2].set(jnp.cos(arg[:, :n_cos]))
    # torch buffer is [1, d_model, max_len, 1]; keep the dense [d_model, max_len] core.
    return (scale_factor * pe).T                                                     # [D, L]


def build_pe_slab(pe_dt: jnp.ndarray, T: int, F: int, dtype) -> jnp.ndarray:
    """Lane-dense, pre-broadcast PE slab [C, T*F]. Build once per (T, F, dtype) and reuse."""
    C, max_len = pe_dt.shape
    if T > max_len:
        raise ValueError(f"time length T={T} exceeds positional table max_len={max_len}")
    return jnp.broadcast_to(pe_dt[:, :T, None], (C, T, F)).reshape(C, T * F).astype(dtype)


def _tape_kernel(pe_ref, x_ref, o_ref):
    # pe_ref: [cc, TF]   x_ref / o_ref: [bb, cc, TF]. Pure elementwise VPU add;
    # broadcast only along the (cheap) leading block axis.
    o_ref[...] = (x_ref[...] + pe_ref[...][None, :, :]).astype(o_ref.dtype)


def _sublane_pack(itemsize: int) -> int:
    return {4: 8, 2: 16, 1: 32}.get(itemsize, 8)


def _choose_blocks(B: int, C: int, TF: int, itemsize: int):
    """Pick (bb, cc) so one x block is ~_TARGET_BLOCK_BYTES. No >=2-step clamp,
    no divisor-of-B requirement (grid uses cdiv with a partial final block)."""
    row_bytes = TF * itemsize
    per_batch = C * row_bytes
    if per_batch <= _TARGET_BLOCK_BYTES:
        cc = C
        bb = int(max(1, min(B, _TARGET_BLOCK_BYTES // per_batch)))
    else:
        # One batch row is already bigger than the target: tile channels too.
        bb = 1
        cc = int(max(1, _TARGET_BLOCK_BYTES // row_bytes))
        if cc < C:
            pack = _sublane_pack(itemsize)
            cc = max(pack, (cc // pack) * pack)   # keep (8,128)-style sublane alignment
        cc = min(cc, C)
    return bb, cc


def _vmem_cap_bytes() -> int:
    try:
        return int(pltpu.get_tpu_info().vmem_capacity_bytes)
    except Exception:
        return _DEFAULT_VMEM_CAP


def _tape_call(x: jnp.ndarray, pe_slab: jnp.ndarray, *, alias_input: bool) -> jnp.ndarray:
    """x: [B, C, T, F]; pe_slab: prebuilt [C, T*F]. Returns x + pe (inference dropout)."""
    B, C, T, F = x.shape
    TF = T * F
    if pe_slab.shape != (C, TF):
        raise ValueError(f"pe_slab shape {pe_slab.shape} != {(C, TF)}")

    itemsize = jnp.dtype(x.dtype).itemsize
    pe_itemsize = jnp.dtype(pe_slab.dtype).itemsize

    bb, cc = _choose_blocks(B, C, TF, itemsize)
    grid = (pl.cdiv(B, bb), pl.cdiv(C, cc))

    # Explicit VMEM budget: double-buffered in + out blocks + PE + slack.
    block_bytes = bb * cc * TF * itemsize
    pe_block_bytes = cc * TF * pe_itemsize
    vmem_needed = 4 * block_bytes + 2 * pe_block_bytes + _VMEM_SLACK_BYTES
    vmem_limit = int(min(max(vmem_needed, 16 * 1024 * 1024), _vmem_cap_bytes()))

    cost = pl.CostEstimate(
        flops=B * C * TF,
        transcendentals=0,
        bytes_accessed=2 * x.size * itemsize + pe_slab.size * pe_itemsize,
    )

    out3 = pl.pallas_call(
        _tape_kernel,
        out_shape=jax.ShapeDtypeStruct((B, C, TF), x.dtype),
        grid_spec=pl.GridSpec(
            grid=grid,
            in_specs=[
                pl.BlockSpec((cc, TF), lambda b, c: (c, 0)),          # PE slab (VMEM-resident when cc == C)
                pl.BlockSpec((bb, cc, TF), lambda b, c: (b, c, 0)),   # x batch/channel chunk
            ],
            out_specs=pl.BlockSpec((bb, cc, TF), lambda b, c: (b, c, 0)),
        ),
        compiler_params=pltpu.CompilerParams(
            dimension_semantics=("parallel", "parallel"),
            vmem_limit_bytes=vmem_limit,
        ),
        cost_estimate=cost,
        input_output_aliases=({1: 0} if alias_input else {}),
    )(pe_slab, x.reshape(B, C, TF))

    return out3.reshape(B, C, T, F)


# Safe default: no aliasing, x remains valid after the call.
tape_forward = jax.jit(partial(_tape_call, alias_input=False))

# In-place variant: aliases x's HBM buffer with the output (no second
# [B, C, T*F] allocation). Use only when x is dead after this op.
tape_forward_inplace = jax.jit(partial(_tape_call, alias_input=True), donate_argnums=(0,))


def tape_reference(x: jnp.ndarray, pe_dt: jnp.ndarray) -> jnp.ndarray:
    T = x.shape[2]
    return x + pe_dt[None, :, :T, None].astype(x.dtype)


if __name__ == "__main__":
    # jit-level donation is best-effort; silence the benign "not usable" note
    # if XLA declines to reuse the donated buffer for this tiny demo shape.
    warnings.filterwarnings("ignore", message="Some donated buffers were not usable")

    # Small shapes consistent with the module: [batch*nvars, d_model, time, freq]
    B, d_model, T, F = 2, 32, 8, 16          # T*F = 128 -> lane-dense output
    max_len = 43

    key = jax.random.PRNGKey(0)
    x = jax.random.normal(key, (B, d_model, T, F), dtype=jnp.float32)

    # Built once (hoisted out of the per-call path), reused across forward calls.
    pe_dt = _build_pe(d_model, max_len=max_len, scale_factor=1.0)   # [d_model, max_len]
    pe_slab = build_pe_slab(pe_dt, T, F, x.dtype)                   # [d_model, T*F]

    ref = jax.block_until_ready(tape_reference(x, pe_dt))           # before donating x

    out = tape_forward_inplace(x, pe_slab)                          # x is dead after this
    out = jax.block_until_ready(out)

    assert out.shape == ref.shape and out.dtype == ref.dtype
    assert jnp.allclose(out, ref, atol=1e-6), "mismatch vs reference"

    print("KERNEL_OK")
</pallas_src>

<mosaic_0001>
module attributes {stable_mosaic.version = 11 : i64} {
  func.func @_tape_kernel(%arg0: i32, %arg1: i32, %arg2: memref<32x128xf32, #tpu.memory_space<vmem>>, %arg3: memref<2x32x128xf32, #tpu.memory_space<vmem>>, %arg4: memref<2x32x128xf32, #tpu.memory_space<vmem>>) attributes {dimension_semantics = [#tpu.dimension_semantics<parallel>, #tpu.dimension_semantics<parallel>], iteration_bounds = array<i64: 1, 1>, scalar_prefetch = 0 : i64, scratch_operands = 0 : i64, tpu.core_type = #tpu.core_type<tc>, window_params = [{transform_indices = @transform_0, window_bounds = array<i64: 32, 128>}, {transform_indices = @transform_1, window_bounds = array<i64: 2, 32, 128>}, {transform_indices = @transform_2, window_bounds = array<i64: 2, 32, 128>}]} {
    %c0 = arith.constant 0 : index
    %c0_0 = arith.constant 0 : index
    %c0_1 = arith.constant 0 : index
    %0 = vector.load %arg3[%c0, %c0_0, %c0_1] : memref<2x32x128xf32, #tpu.memory_space<vmem>>, vector<2x32x128xf32>
    %c0_2 = arith.constant 0 : index
    %c0_3 = arith.constant 0 : index
    %1 = vector.load %arg2[%c0_2, %c0_3] : memref<32x128xf32, #tpu.memory_space<vmem>>, vector<32x128xf32>
    %2 = vector.shape_cast %1 : vector<32x128xf32> to vector<1x32x128xf32>
    %3 = vector.broadcast %2 : vector<1x32x128xf32> to vector<2x32x128xf32>
    %4 = arith.addf %0, %3 : vector<2x32x128xf32>
    %c0_4 = arith.constant 0 : index
    %c0_5 = arith.constant 0 : index
    %c0_6 = arith.constant 0 : index
    %5 = vector.load %arg4[%c0_4, %c0_5, %c0_6] : memref<2x32x128xf32, #tpu.memory_space<vmem>>, vector<2x32x128xf32>
    tpu.vector_store %arg4[%c0_4, %c0_5, %c0_6], %4 {strides = array<i32>} : memref<2x32x128xf32, #tpu.memory_space<vmem>>, vector<2x32x128xf32>,
    return
  }
  func.func @transform_0(%arg0: i32, %arg1: i32) -> (i32, i32) {
    %c0_i32 = arith.constant 0 : i32
    %c0_i32_0 = arith.constant 0 : i32
    return %arg1, %c0_i32 : i32, i32
  }
  func.func @transform_1(%arg0: i32, %arg1: i32) -> (i32, i32, i32) {
    %c0_i32 = arith.constant 0 : i32
    %c0_i32_0 = arith.constant 0 : i32
    return %arg0, %arg1, %c0_i32 : i32, i32, i32
  }
  func.func @transform_2(%arg0: i32, %arg1: i32) -> (i32, i32, i32) {
    %c0_i32 = arith.constant 0 : i32
    %c0_i32_0 = arith.constant 0 : i32
    return %arg0, %arg1, %c0_i32 : i32, i32, i32
  }
}

</mosaic_0001>

<llo_original>
// kernel: _tape_call.1
$region0: #{_tape_call.1}
  #allocation0 [shape = 'u32[]', space=smem, size = 0x4, offset = 0x4, fixed_abs, tag = 'smem constant byte address 0x4 - core index']
  #allocation1 [shape = 'u32[144,128]{1,0:T(1,128)}', space=vmem, size = 0x12000, scoped, tag = 'internal scratch']
  %s0 = inlined_call_operand.vmem [shape: f32[32,128], index: 0, kind: input, shape index: {}]
  %s1 = inlined_call_operand.vmem [shape: f32[2,32,128], index: 1, kind: input, shape index: {}, may-alias: {1,2}]
  %s2 = inlined_call_operand.vmem [shape: f32[2,32,128], index: 2, kind: output, shape index: {}, may-alias: {1,2}]
  %s3 = sld [smem:[#allocation0]]
  $region18: #{_tape_call.1} parent=0
    _
  %s5 = ssub.s32 1, %s3
  %s6 = scalar_select 0, %s5, %s3
  // Predicated region
  $region2: #{_tape_call.1} parent=0 // pred_check
    _
  $region3: #{_tape_call.1} parent=0 // pred_check_branch
    %8 = sbr.rel (0) target = $region5
  $region4: #{_tape_call.1} parent=0 // pred_region
    _
  $region5: #{_tape_call.1} parent=0 // pred_fallthru
    _
  // Predicated region
  $region6: #{_tape_call.1} parent=0 // pred_check
    _
  $region7: #{_tape_call.1} parent=0 // pred_check_branch
    %10 = sbr.rel (0) target = $region9
  $region8: #{_tape_call.1} parent=0 // pred_region
    _
  $region9: #{_tape_call.1} parent=0 // pred_fallthru
    _
  %v11 = vld [vmem:[%s1] sm:$0xff]
  %v12 = vld [vmem:[%s1 + $0x8] sm:$0xff]
  %v13 = vld [vmem:[%s1 + $0x10] sm:$0xff]
  %v14 = vld [vmem:[%s1 + $0x18] sm:$0xff]
  %v15 = vld [vmem:[%s1 + $0x20] sm:$0xff]
  %v16 = vld [vmem:[%s1 + $0x28] sm:$0xff]
  %v17 = vld [vmem:[%s1 + $0x30] sm:$0xff]
  %v18 = vld [vmem:[%s1 + $0x38] sm:$0xff]
  %v19 = vld [vmem:[%s0] sm:$0xff]
  %v20 = vld [vmem:[%s0 + $0x8] sm:$0xff]
  %v21 = vld [vmem:[%s0 + $0x10] sm:$0xff]
  %v22 = vld [vmem:[%s0 + $0x18] sm:$0xff]
  %v23 = vadd.f32 %v11, %v19
  %v24 = vadd.f32 %v12, %v20
  %v25 = vadd.f32 %v13, %v21
  %v26 = vadd.f32 %v14, %v22
  %v27 = vadd.f32 %v15, %v19
  %v28 = vadd.f32 %v16, %v20
  %v29 = vadd.f32 %v17, %v21
  %v30 = vadd.f32 %v18, %v22
  %31 = vst [vmem:[%s2] sm:$0xff] %v23
  %32 = vst [vmem:[%s2 + $0x8] sm:$0xff] %v24
  %33 = vst [vmem:[%s2 + $0x10] sm:$0xff] %v25
  %34 = vst [vmem:[%s2 + $0x18] sm:$0xff] %v26
  %35 = vst [vmem:[%s2 + $0x20] sm:$0xff] %v27
  %36 = vst [vmem:[%s2 + $0x28] sm:$0xff] %v28
  %37 = vst [vmem:[%s2 + $0x30] sm:$0xff] %v29
  %38 = vst [vmem:[%s2 + $0x38] sm:$0xff] %v30
  // Predicated region
  $region10: #{_tape_call.1} parent=0 // pred_check
    _
  $region11: #{_tape_call.1} parent=0 // pred_check_branch
    %40 = sbr.rel (0) target = $region13
  $region12: #{_tape_call.1} parent=0 // pred_region
    _
  $region13: #{_tape_call.1} parent=0 // pred_fallthru
    _
  // Predicated region
  $region14: #{_tape_call.1} parent=0 // pred_check
    _
  $region15: #{_tape_call.1} parent=0 // pred_check_branch
    %42 = sbr.rel (0) target = $region17
  $region16: #{_tape_call.1} parent=0 // pred_region
    _
  $region17: #{_tape_call.1} parent=0 // pred_fallthru
    _

</llo_original>
